<compile_context>
chip_gen: v7x
topology: tpu7x:2x2x1
jax: 0.10.0
libtpu: 0.0.40
codegen_flags: <defaults>
</compile_context>

<pallas_src>
import math

import jax
import jax.numpy as jnp
from jax.experimental import pallas as pl
from jax.experimental.pallas import tpu as pltpu


def _round_up(n, m):
    return ((n + m - 1) // m) * m


# --------------------------- module configuration ---------------------------
def build_decoder_config(depth, encoder_channels, input_length):
    """Replicates InceptionDecoder.__init__ bookkeeping (channel pairs + output_padding)."""
    decoder_channels = encoder_channels[::-1]
    layers = []
    current_length = 1
    for d in range(depth):
        cin = decoder_channels[d]
        cout = decoder_channels[d + 1]
        stride, kernel_size = 2, 2
        desired_length = input_length // 2 ** (depth - d - 1)
        output_length = (current_length - 1) * stride + kernel_size
        output_padding = desired_length - output_length
        if output_padding < 0 or output_padding >= stride:
            output_padding = 0
        current_length = desired_length
        layers.append((cin, cout, output_padding))
    return layers


def init_params(layers, key):
    """W: (Cin, Cout, 2) (PyTorch ConvTranspose1d layout), b: (Cout,)."""
    params = []
    for cin, cout, _ in layers:
        key, kw, kb = jax.random.split(key, 3)
        bound = 1.0 / math.sqrt(cin * 2)
        W = jax.random.uniform(kw, (cin, cout, 2), jnp.float32, -bound, bound)
        b = jax.random.uniform(kb, (cout,), jnp.float32, -bound, bound)
        params.append((W, b))
    return params


# --------------------------- one-time weight packing -------------------------
def pack_params(params, layers, input_length0=1, compute_dtype=jnp.float32,
                lane_multiple=128):
    """Pack per-layer ConvTranspose1d(k=2,s=2) weights into position-major block-diagonal
    matmul weights.  The NCL<->position-major permutations are baked into the first layer's
    rows and the last layer's columns/bias, so the fused kernel consumes a plain NCL-flat
    input row and produces an NCL-flat output row (wrapper does only free reshapes).
    Intermediate widths are zero-padded to multiples of `lane_multiple` for lane-dense
    activations/MXU tiles; padded channels carry zero weight+bias so ReLU keeps them 0."""
    Ws, bs = [], []
    P = input_length0               # positions per sample at the current layer's input
    n_layers = len(layers)
    prev_col_pad = 0
    for li, ((W, b), (cin, cout, output_padding)) in enumerate(zip(params, layers)):
        # ConvTranspose1d(k=2,s=2): input pos p -> output pos 2p (tap0), 2p+1 (tap1)
        w2 = jnp.concatenate([W[:, :, 0], W[:, :, 1]], axis=1)       # (cin, 2*cout)
        Wblk = jnp.kron(jnp.eye(P, dtype=jnp.float32), w2)           # (P*cin, 2*P*cout)
        out_pos = 2 * P + output_padding
        if output_padding:
            # padded trailing positions see zero weights -> ReLU(bias), matching PyTorch
            Wblk = jnp.pad(Wblk, ((0, 0), (0, output_padding * cout)))
        bblk = jnp.tile(b, (out_pos,))[None, :]                      # (1, out_pos*cout)

        if li == 0:
            # bake NCL -> position-major input permutation into the rows:
            # flat NCL column j = c*P + p  must read position-major row p*cin + c
            j = jnp.arange(P * cin)
            Wblk = Wblk[(j % P) * cin + (j // P), :]
        if prev_col_pad:
            # zero rows for the previous layer's zero lane-padding columns
            Wblk = jnp.pad(Wblk, ((0, prev_col_pad), (0, 0)))

        if li == n_layers - 1:
            # bake position-major -> NCL output permutation into columns + bias:
            # flat NCL column j = o*out_pos + p pulls position-major column p*cout + o
            j = jnp.arange(out_pos * cout)
            perm = (j % out_pos) * cout + (j // out_pos)
            Wblk = Wblk[:, perm]
            bblk = bblk[:, perm]
            prev_col_pad = 0
        else:
            width = Wblk.shape[1]
            pad = _round_up(width, lane_multiple) - width
            if pad:
                Wblk = jnp.pad(Wblk, ((0, 0), (0, pad)))
                bblk = jnp.pad(bblk, ((0, 0), (0, pad)))
            prev_col_pad = pad

        Ws.append(Wblk)
        bs.append(bblk)
        P = out_pos

    in_width = input_length0 * layers[0][0]
    out_width = P * layers[-1][1]
    Ws = tuple(w.astype(compute_dtype) for w in Ws)
    bs = tuple(b.astype(jnp.float32) for b in bs)     # bias added in f32 inside the kernel
    meta = dict(in_width=in_width, out_width=out_width,
                final_positions=P, final_channels=layers[-1][1])
    return Ws, bs, meta


# ------------------------------- Pallas kernel --------------------------------
def _make_fused_kernel(num_layers):
    def kernel(*refs):
        # refs = (x, W_0..W_{D-1}, b_0..b_{D-1}, out)
        x_ref = refs[0]
        w_refs = refs[1:1 + num_layers]
        b_refs = refs[1 + num_layers:1 + 2 * num_layers]
        o_ref = refs[-1]

        acc = x_ref[...]
        for w_ref, b_ref in zip(w_refs, b_refs):
            y = jnp.dot(acc.astype(w_ref.dtype), w_ref[...],
                        preferred_element_type=jnp.float32)   # f32 MXU accumulation
            acc = jnp.maximum(y + b_ref[...], 0.0)            # bias + ReLU in f32
        o_ref[...] = acc.astype(o_ref.dtype)
    return kernel


def _vmem_budget_bytes():
    """Per-generation VMEM budget: ~75% of physical capacity (96 MiB v5e/v6e, 48 MiB v7x)."""
    try:
        cap = pltpu.get_tpu_info().vmem_capacity_bytes
    except Exception:
        cap = 64 * 1024 * 1024     # conservative (v7x physical)
    return max(int(cap) * 3 // 4, 32 * 1024 * 1024)


# ------------------------------- forward pass --------------------------------
def make_fused_forward(layers, meta, compute_dtype=jnp.float32, out_dtype=jnp.float32,
                       row_tile=512, single_buffer_weights=True):
    """Builds a jitted forward: x (N, C0, L0) in NCL layout -> (N, C_last, L_final)."""
    num_layers = len(layers)
    in_width = meta["in_width"]
    out_width = meta["out_width"]
    l_final = meta["final_positions"]
    c_final = meta["final_channels"]
    vmem_bytes = _vmem_budget_bytes()

    def forward(x, Ws, bs):
        N, C0, L0 = x.shape
        assert C0 * L0 == in_width, "input shape inconsistent with packed params"
        # NCL is row-major contiguous; the NCL->position-major permutation is baked into
        # Ws[0]'s rows, so this is a free reshape (no transpose, no extra HBM pass).
        x2d = x.reshape(N, in_width).astype(compute_dtype)

        align = 16 if jnp.dtype(compute_dtype) == jnp.dtype(jnp.bfloat16) else 8
        if N <= 2 * align:
            tm = N                      # tiny batch: single block of full rows
        else:
            # >= 2 grid steps so v7x's 2nd TensorCore gets work; rows sublane-aligned.
            tm = min(row_tile, _round_up(pl.cdiv(N, 2), align))
        grid = (pl.cdiv(N, tm),)

        def const_spec(shape):
            # Constant (0,0) index map -> stays VMEM-resident across grid steps.
            if single_buffer_weights:
                return pl.BlockSpec(shape, lambda i: (0, 0), pipeline_mode=pl.Buffered(1))
            return pl.BlockSpec(shape, lambda i: (0, 0))

        in_specs = [pl.BlockSpec((tm, in_width), lambda i: (i, 0))]
        in_specs += [const_spec(w.shape) for w in Ws]
        in_specs += [const_spec(b.shape) for b in bs]

        y2d = pl.pallas_call(
            _make_fused_kernel(num_layers),
            out_shape=jax.ShapeDtypeStruct((N, out_width), out_dtype),
            grid=grid,
            in_specs=in_specs,
            out_specs=pl.BlockSpec((tm, out_width), lambda i: (i, 0)),
            compiler_params=pltpu.CompilerParams(
                dimension_semantics=("parallel",),
                vmem_limit_bytes=vmem_bytes,
            ),
        )(x2d, *Ws, *bs)

        # Output columns are already in NCL-flat order (permutation baked into Ws[-1]),
        # so this reshape is free — no slice, no transpose.
        return y2d.reshape(N, c_final, l_final)

    return jax.jit(forward)


def build_and_run(layers, meta, x, Ws, bs, *, compute_dtype, out_dtype):
    """Build the forward and run it once; falls back to default double-buffered weights if
    pipeline_mode=pl.Buffered(1) isn't supported by the installed jax version."""
    try:
        fwd = make_fused_forward(layers, meta, compute_dtype=compute_dtype,
                                 out_dtype=out_dtype, single_buffer_weights=True)
        return fwd, jax.block_until_ready(fwd(x, Ws, bs))
    except Exception:
        fwd = make_fused_forward(layers, meta, compute_dtype=compute_dtype,
                                 out_dtype=out_dtype, single_buffer_weights=False)
        return fwd, jax.block_until_ready(fwd(x, Ws, bs))


# ------------------------------ pure-JAX reference ---------------------------
def reference_forward(x, params, layers):
    for (W, b), (cin, cout, output_padding) in zip(params, layers):
        N, _, L = x.shape
        # out[n, o, 2t + k] = sum_c x[n, c, t] * W[c, o, k]   (ReLU after every layer,
        # matching the PyTorch module which appends ReLU after each ConvTranspose1d)
        y = jnp.einsum("ncl,cok->nolk", x, W).reshape(N, cout, 2 * L)
        if output_padding:
            y = jnp.concatenate([y, jnp.zeros((N, cout, output_padding), jnp.float32)], axis=2)
        y = y + b[None, :, None]
        x = jnp.maximum(y, 0.0)
    return x


if __name__ == "__main__":
    # Small shapes consistent with the module; num_filters is unused by the forward pass.
    num_filters = 8          # unused (matches original signature)
    depth = 3
    encoder_channels = [4, 8, 16, 32]   # decoder_channels = [32, 16, 8, 4]
    input_length = 8
    N = 2

    layers = build_decoder_config(depth, encoder_channels, input_length)

    key = jax.random.PRNGKey(0)
    key, kx = jax.random.split(key)
    params = init_params(layers, key)

    # Decoder input: length 1, channels = decoder_channels[0] = encoder_channels[-1]
    x = jax.random.normal(kx, (N, encoder_channels[-1], 1), jnp.float32)

    ref = jax.block_until_ready(reference_forward(x, params, layers))

    # ---- f32 fused kernel ----
    # (tolerance kept modest so the check is robust across MXU f32-matmul precision modes;
    #  a packing/permutation bug would produce errors ~10-50x larger than this bound)
    Ws, bs, meta = pack_params(params, layers, input_length0=1, compute_dtype=jnp.float32)
    fwd_f32, out = build_and_run(layers, meta, x, Ws, bs,
                                 compute_dtype=jnp.float32, out_dtype=jnp.float32)
    assert out.shape == (N, encoder_channels[0], input_length), out.shape
    err = float(jnp.max(jnp.abs(out - ref)))
    assert err < 2e-2, err

    # ---- bf16 fused kernel (halved weight/act/output HBM bytes, f32 MXU accumulation) ----
    Wsb, bsb, metab = pack_params(params, layers, input_length0=1, compute_dtype=jnp.bfloat16)
    fwd_bf16, out_b = build_and_run(layers, metab, x, Wsb, bsb,
                                    compute_dtype=jnp.bfloat16, out_dtype=jnp.bfloat16)
    assert out_b.shape == (N, encoder_channels[0], input_length), out_b.shape
    err_b = float(jnp.max(jnp.abs(out_b.astype(jnp.float32) - ref)))
    assert err_b < 6e-2, err_b

    print("KERNEL_OK")
</pallas_src>

<mosaic_0001>
module attributes {stable_mosaic.version = 11 : i64} {
  func.func @kernel(%arg0: i32, %arg1: memref<2x32xf32, #tpu.memory_space<vmem>>, %arg2: memref<32x128xf32, #tpu.memory_space<vmem>>, %arg3: memref<128x128xf32, #tpu.memory_space<vmem>>, %arg4: memref<128x32xf32, #tpu.memory_space<vmem>>, %arg5: memref<1x128xf32, #tpu.memory_space<vmem>>, %arg6: memref<1x128xf32, #tpu.memory_space<vmem>>, %arg7: memref<1x32xf32, #tpu.memory_space<vmem>>, %arg8: memref<2x32xf32, #tpu.memory_space<vmem>>) attributes {dimension_semantics = [#tpu.dimension_semantics<parallel>], iteration_bounds = array<i64: 1>, scalar_prefetch = 0 : i64, scratch_operands = 0 : i64, tpu.core_type = #tpu.core_type<tc>, window_params = [{transform_indices = @transform_0, window_bounds = array<i64: 2, 32>}, {pipeline_mode = #tpu.pipeline_mode<synchronous>, transform_indices = @transform_1, window_bounds = array<i64: 32, 128>}, {pipeline_mode = #tpu.pipeline_mode<synchronous>, transform_indices = @transform_2, window_bounds = array<i64: 128, 128>}, {pipeline_mode = #tpu.pipeline_mode<synchronous>, transform_indices = @transform_3, window_bounds = array<i64: 128, 32>}, {pipeline_mode = #tpu.pipeline_mode<synchronous>, transform_indices = @transform_4, window_bounds = array<i64: 1, 128>}, {pipeline_mode = #tpu.pipeline_mode<synchronous>, transform_indices = @transform_5, window_bounds = array<i64: 1, 128>}, {pipeline_mode = #tpu.pipeline_mode<synchronous>, transform_indices = @transform_6, window_bounds = array<i64: 1, 32>}, {transform_indices = @transform_7, window_bounds = array<i64: 2, 32>}]} {
    %c0 = arith.constant 0 : index
    %c0_0 = arith.constant 0 : index
    %0 = vector.load %arg1[%c0, %c0_0] : memref<2x32xf32, #tpu.memory_space<vmem>>, vector<2x32xf32>
    %c0_1 = arith.constant 0 : index
    %c0_2 = arith.constant 0 : index
    %1 = vector.load %arg2[%c0_1, %c0_2] : memref<32x128xf32, #tpu.memory_space<vmem>>, vector<32x128xf32>
    %cst = arith.constant dense<0.000000e+00> : vector<2x128xf32>
    %2 = tpu.matmul %0, %1, %cst {dimension_numbers = #tpu.dot_dimension_numbers<[1], [0], [0], [1], [0, 0, 1, 1], [], []>} : vector<2x32xf32>, vector<32x128xf32>, vector<2x128xf32> -> vector<2x128xf32>
    %c0_3 = arith.constant 0 : index
    %c0_4 = arith.constant 0 : index
    %3 = vector.load %arg5[%c0_3, %c0_4] : memref<1x128xf32, #tpu.memory_space<vmem>>, vector<1x128xf32>
    %4 = vector.broadcast %3 : vector<1x128xf32> to vector<2x128xf32>
    %5 = arith.addf %2, %4 : vector<2x128xf32>
    %cst_5 = arith.constant 0.000000e+00 : f32
    %6 = vector.broadcast %cst_5 : f32 to vector<2x128xf32>
    %7 = arith.maximumf %5, %6 : vector<2x128xf32>
    %c0_6 = arith.constant 0 : index
    %c0_7 = arith.constant 0 : index
    %8 = vector.load %arg3[%c0_6, %c0_7] : memref<128x128xf32, #tpu.memory_space<vmem>>, vector<128x128xf32>
    %cst_8 = arith.constant dense<0.000000e+00> : vector<2x128xf32>
    %9 = tpu.matmul %7, %8, %cst_8 {dimension_numbers = #tpu.dot_dimension_numbers<[1], [0], [0], [1], [0, 0, 1, 1], [], []>} : vector<2x128xf32>, vector<128x128xf32>, vector<2x128xf32> -> vector<2x128xf32>
    %c0_9 = arith.constant 0 : index
    %c0_10 = arith.constant 0 : index
    %10 = vector.load %arg6[%c0_9, %c0_10] : memref<1x128xf32, #tpu.memory_space<vmem>>, vector<1x128xf32>
    %11 = vector.broadcast %10 : vector<1x128xf32> to vector<2x128xf32>
    %12 = arith.addf %9, %11 : vector<2x128xf32>
    %cst_11 = arith.constant 0.000000e+00 : f32
    %13 = vector.broadcast %cst_11 : f32 to vector<2x128xf32>
    %14 = arith.maximumf %12, %13 : vector<2x128xf32>
    %c0_12 = arith.constant 0 : index
    %c0_13 = arith.constant 0 : index
    %15 = vector.load %arg4[%c0_12, %c0_13] : memref<128x32xf32, #tpu.memory_space<vmem>>, vector<128x32xf32>
    %cst_14 = arith.constant dense<0.000000e+00> : vector<2x32xf32>
    %16 = tpu.matmul %14, %15, %cst_14 {dimension_numbers = #tpu.dot_dimension_numbers<[1], [0], [0], [1], [0, 0, 1, 1], [], []>} : vector<2x128xf32>, vector<128x32xf32>, vector<2x32xf32> -> vector<2x32xf32>
    %c0_15 = arith.constant 0 : index
    %c0_16 = arith.constant 0 : index
    %17 = vector.load %arg7[%c0_15, %c0_16] : memref<1x32xf32, #tpu.memory_space<vmem>>, vector<1x32xf32>
    %18 = vector.broadcast %17 : vector<1x32xf32> to vector<2x32xf32>
    %19 = arith.addf %16, %18 : vector<2x32xf32>
    %cst_17 = arith.constant 0.000000e+00 : f32
    %20 = vector.broadcast %cst_17 : f32 to vector<2x32xf32>
    %21 = arith.maximumf %19, %20 : vector<2x32xf32>
    %c0_18 = arith.constant 0 : index
    %c0_19 = arith.constant 0 : index
    %22 = vector.load %arg8[%c0_18, %c0_19] : memref<2x32xf32, #tpu.memory_space<vmem>>, vector<2x32xf32>
    tpu.vector_store %arg8[%c0_18, %c0_19], %21 {strides = array<i32>} : memref<2x32xf32, #tpu.memory_space<vmem>>, vector<2x32xf32>,
    return
  }
  func.func @transform_0(%arg0: i32) -> (i32, i32) {
    %c0_i32 = arith.constant 0 : i32
    %c0_i32_0 = arith.constant 0 : i32
    return %arg0, %c0_i32 : i32, i32
  }
  func.func @transform_1(%arg0: i32) -> (i32, i32) {
    %c0_i32 = arith.constant 0 : i32
    %c0_i32_0 = arith.constant 0 : i32
    %c0_i32_1 = arith.constant 0 : i32
    return %c0_i32, %c0_i32_0 : i32, i32
  }
  func.func @transform_2(%arg0: i32) -> (i32, i32) {
    %c0_i32 = arith.constant 0 : i32
    %c0_i32_0 = arith.constant 0 : i32
    %c0_i32_1 = arith.constant 0 : i32
    return %c0_i32, %c0_i32_0 : i32, i32
  }
  func.func @transform_3(%arg0: i32) -> (i32, i32) {
    %c0_i32 = arith.constant 0 : i32
    %c0_i32_0 = arith.constant 0 : i32
    %c0_i32_1 = arith.constant 0 : i32
    return %c0_i32, %c0_i32_0 : i32, i32
  }
  func.func @transform_4(%arg0: i32) -> (i32, i32) {
    %c0_i32 = arith.constant 0 : i32
    %c0_i32_0 = arith.constant 0 : i32
    %c0_i32_1 = arith.constant 0 : i32
    return %c0_i32, %c0_i32_0 : i32, i32
  }
  func.func @transform_5(%arg0: i32) -> (i32, i32) {
    %c0_i32 = arith.constant 0 : i32
    %c0_i32_0 = arith.constant 0 : i32
    %c0_i32_1 = arith.constant 0 : i32
    return %c0_i32, %c0_i32_0 : i32, i32
  }
  func.func @transform_6(%arg0: i32) -> (i32, i32) {
    %c0_i32 = arith.constant 0 : i32
    %c0_i32_0 = arith.constant 0 : i32
    %c0_i32_1 = arith.constant 0 : i32
    return %c0_i32, %c0_i32_0 : i32, i32
  }
  func.func @transform_7(%arg0: i32) -> (i32, i32) {
    %c0_i32 = arith.constant 0 : i32
    %c0_i32_0 = arith.constant 0 : i32
    return %arg0, %c0_i32 : i32, i32
  }
}

module attributes {stable_mosaic.version = 11 : i64} {
  func.func @kernel(%arg0: i32, %arg1: memref<2x32xf32, #tpu.memory_space<vmem>>, %arg2: memref<32x128xf32, #tpu.memory_space<vmem>>, %arg3: memref<128x128xf32, #tpu.memory_space<vmem>>, %arg4: memref<128x32xf32, #tpu.memory_space<vmem>>, %arg5: memref<1x128xf32, #tpu.memory_space<vmem>>, %arg6: memref<1x128xf32, #tpu.memory_space<vmem>>, %arg7: memref<1x32xf32, #tpu.memory_space<vmem>>, %arg8: memref<2x32xf32, #tpu.memory_space<vmem>>) attributes {dimension_semantics = [#tpu.dimension_semantics<parallel>], iteration_bounds = array<i64: 1>, scalar_prefetch = 0 : i64, scratch_operands = 0 : i64, tpu.core_type = #tpu.core_type<tc>, window_params = [{transform_indices = @transform_0, window_bounds = array<i64: 2, 32>}, {pipeline_mode = #tpu.pipeline_mode<synchronous>, transform_indices = @transform_1, window_bounds = array<i64: 32, 128>}, {pipeline_mode = #tpu.pipeline_mode<synchronous>, transform_indices = @transform_2, window_bounds = array<i64: 128, 128>}, {pipeline_mode = #tpu.pipeline_mode<synchronous>, transform_indices = @transform_3, window_bounds = array<i64: 128, 32>}, {pipeline_mode = #tpu.pipeline_mode<synchronous>, transform_indices = @transform_4, window_bounds = array<i64: 1, 128>}, {pipeline_mode = #tpu.pipeline_mode<synchronous>, transform_indices = @transform_5, window_bounds = array<i64: 1, 128>}, {pipeline_mode = #tpu.pipeline_mode<synchronous>, transform_indices = @transform_6, window_bounds = array<i64: 1, 32>}, {transform_indices = @transform_7, window_bounds = array<i64: 2, 32>}]} {
    %c0 = arith.constant 0 : index
    %c0_0 = arith.constant 0 : index
    %0 = vector.load %arg1[%c0, %c0_0] : memref<2x32xf32, #tpu.memory_space<vmem>>, vector<2x32xf32>
    %c0_1 = arith.constant 0 : index
    %c0_2 = arith.constant 0 : index
    %1 = vector.load %arg2[%c0_1, %c0_2] : memref<32x128xf32, #tpu.memory_space<vmem>>, vector<32x128xf32>
    %cst = arith.constant dense<0.000000e+00> : vector<2x128xf32>
    %2 = tpu.matmul %0, %1, %cst {dimension_numbers = #tpu.dot_dimension_numbers<[1], [0], [0], [1], [0, 0, 1, 1], [], []>} : vector<2x32xf32>, vector<32x128xf32>, vector<2x128xf32> -> vector<2x128xf32>
    %c0_3 = arith.constant 0 : index
    %c0_4 = arith.constant 0 : index
    %3 = vector.load %arg5[%c0_3, %c0_4] : memref<1x128xf32, #tpu.memory_space<vmem>>, vector<1x128xf32>
    %4 = vector.broadcast %3 : vector<1x128xf32> to vector<2x128xf32>
    %5 = arith.addf %2, %4 : vector<2x128xf32>
    %cst_5 = arith.constant 0.000000e+00 : f32
    %6 = vector.broadcast %cst_5 : f32 to vector<2x128xf32>
    %7 = arith.maximumf %5, %6 : vector<2x128xf32>
    %c0_6 = arith.constant 0 : index
    %c0_7 = arith.constant 0 : index
    %8 = vector.load %arg3[%c0_6, %c0_7] : memref<128x128xf32, #tpu.memory_space<vmem>>, vector<128x128xf32>
    %cst_8 = arith.constant dense<0.000000e+00> : vector<2x128xf32>
    %9 = tpu.matmul %7, %8, %cst_8 {dimension_numbers = #tpu.dot_dimension_numbers<[1], [0], [0], [1], [0, 0, 1, 1], [], []>} : vector<2x128xf32>, vector<128x128xf32>, vector<2x128xf32> -> vector<2x128xf32>
    %c0_9 = arith.constant 0 : index
    %c0_10 = arith.constant 0 : index
    %10 = vector.load %arg6[%c0_9, %c0_10] : memref<1x128xf32, #tpu.memory_space<vmem>>, vector<1x128xf32>
    %11 = vector.broadcast %10 : vector<1x128xf32> to vector<2x128xf32>
    %12 = arith.addf %9, %11 : vector<2x128xf32>
    %cst_11 = arith.constant 0.000000e+00 : f32
    %13 = vector.broadcast %cst_11 : f32 to vector<2x128xf32>
    %14 = arith.maximumf %12, %13 : vector<2x128xf32>
    %c0_12 = arith.constant 0 : index
    %c0_13 = arith.constant 0 : index
    %15 = vector.load %arg4[%c0_12, %c0_13] : memref<128x32xf32, #tpu.memory_space<vmem>>, vector<128x32xf32>
    %cst_14 = arith.constant dense<0.000000e+00> : vector<2x32xf32>
    %16 = tpu.matmul %14, %15, %cst_14 {dimension_numbers = #tpu.dot_dimension_numbers<[1], [0], [0], [1], [0, 0, 1, 1], [], []>} : vector<2x128xf32>, vector<128x32xf32>, vector<2x32xf32> -> vector<2x32xf32>
    %c0_15 = arith.constant 0 : index
    %c0_16 = arith.constant 0 : index
    %17 = vector.load %arg7[%c0_15, %c0_16] : memref<1x32xf32, #tpu.memory_space<vmem>>, vector<1x32xf32>
    %18 = vector.broadcast %17 : vector<1x32xf32> to vector<2x32xf32>
    %19 = arith.addf %16, %18 : vector<2x32xf32>
    %cst_17 = arith.constant 0.000000e+00 : f32
    %20 = vector.broadcast %cst_17 : f32 to vector<2x32xf32>
    %21 = arith.maximumf %19, %20 : vector<2x32xf32>
    %c0_18 = arith.constant 0 : index
    %c0_19 = arith.constant 0 : index
    %22 = vector.load %arg8[%c0_18, %c0_19] : memref<2x32xf32, #tpu.memory_space<vmem>>, vector<2x32xf32>
    tpu.vector_store %arg8[%c0_18, %c0_19], %21 {strides = array<i32>} : memref<2x32xf32, #tpu.memory_space<vmem>>, vector<2x32xf32>,
    return
  }
  func.func @transform_0(%arg0: i32) -> (i32, i32) {
    %c0_i32 = arith.constant 0 : i32
    %c0_i32_0 = arith.constant 0 : i32
    return %arg0, %c0_i32 : i32, i32
  }
  func.func @transform_1(%arg0: i32) -> (i32, i32) {
    %c0_i32 = arith.constant 0 : i32
    %c0_i32_0 = arith.constant 0 : i32
    %c0_i32_1 = arith.constant 0 : i32
    return %c0_i32, %c0_i32_0 : i32, i32
  }
  func.func @transform_2(%arg0: i32) -> (i32, i32) {
    %c0_i32 = arith.constant 0 : i32
    %c0_i32_0 = arith.constant 0 : i32
    %c0_i32_1 = arith.constant 0 : i32
    return %c0_i32, %c0_i32_0 : i32, i32
  }
  func.func @transform_3(%arg0: i32) -> (i32, i32) {
    %c0_i32 = arith.constant 0 : i32
    %c0_i32_0 = arith.constant 0 : i32
    %c0_i32_1 = arith.constant 0 : i32
    return %c0_i32, %c0_i32_0 : i32, i32
  }
  func.func @transform_4(%arg0: i32) -> (i32, i32) {
    %c0_i32 = arith.constant 0 : i32
    %c0_i32_0 = arith.constant 0 : i32
    %c0_i32_1 = arith.constant 0 : i32
    return %c0_i32, %c0_i32_0 : i32, i32
  }
  func.func @transform_5(%arg0: i32) -> (i32, i32) {
    %c0_i32 = arith.constant 0 : i32
    %c0_i32_0 = arith.constant 0 : i32
    %c0_i32_1 = arith.constant 0 : i32
    return %c0_i32, %c0_i32_0 : i32, i32
  }
  func.func @transform_6(%arg0: i32) -> (i32, i32) {
    %c0_i32 = arith.constant 0 : i32
    %c0_i32_0 = arith.constant 0 : i32
    %c0_i32_1 = arith.constant 0 : i32
    return %c0_i32, %c0_i32_0 : i32, i32
  }
  func.func @transform_7(%arg0: i32) -> (i32, i32) {
    %c0_i32 = arith.constant 0 : i32
    %c0_i32_0 = arith.constant 0 : i32
    return %arg0, %c0_i32 : i32, i32
  }
}

</mosaic_0001>

<llo_original>
// kernel: forward.1
$region0: #{forward.1}
  #allocation0 [shape = 'u32[]', space=smem, size = 0x4, offset = 0x4, fixed_abs, tag = 'smem constant byte address 0x4 - core index']
  #allocation1 [shape = 'u32[144,128]{1,0:T(1,128)}', space=vmem, size = 0x12000, scoped, tag = 'internal scratch']
  %s0 = inlined_call_operand.vmem [shape: f32[2,32], index: 0, kind: input, shape index: {}]
  %s1 = inlined_call_operand.vmem [shape: f32[32,128], index: 1, kind: input, shape index: {}]
  %s2 = inlined_call_operand.vmem [shape: f32[128,128], index: 2, kind: input, shape index: {}]
  %s3 = inlined_call_operand.vmem [shape: f32[128,32], index: 3, kind: input, shape index: {}]
  %s4 = inlined_call_operand.vmem [shape: f32[1,128], index: 4, kind: input, shape index: {}]
  %s5 = inlined_call_operand.vmem [shape: f32[1,128], index: 5, kind: input, shape index: {}]
  %s6 = inlined_call_operand.vmem [shape: f32[1,32], index: 6, kind: input, shape index: {}]
  %s7 = inlined_call_operand.vmem [shape: f32[2,32], index: 7, kind: output, shape index: {}]
  %s8 = sld [smem:[#allocation0]]
  $region38: #{forward.1} parent=0
    _
  %s10 = ssub.s32 1, %s8
  %s11 = scalar_select 0, %s10, %s8
  // Predicated region
  $region2: #{forward.1} parent=0 // pred_check
    _
  $region3: #{forward.1} parent=0 // pred_check_branch
    %13 = sbr.rel (0) target = $region5
  $region4: #{forward.1} parent=0 // pred_region
    _
  $region5: #{forward.1} parent=0 // pred_fallthru
    _
  // Predicated region
  $region6: #{forward.1} parent=0 // pred_check
    _
  $region7: #{forward.1} parent=0 // pred_check_branch
    %15 = sbr.rel (0) target = $region9
  $region8: #{forward.1} parent=0 // pred_region
    _
  $region9: #{forward.1} parent=0 // pred_fallthru
    _
  // Predicated region
  $region10: #{forward.1} parent=0 // pred_check
    _
  $region11: #{forward.1} parent=0 // pred_check_branch
    %17 = sbr.rel (0) target = $region13
  $region12: #{forward.1} parent=0 // pred_region
    _
  $region13: #{forward.1} parent=0 // pred_fallthru
    _
  // Predicated region
  $region14: #{forward.1} parent=0 // pred_check
    _
  $region15: #{forward.1} parent=0 // pred_check_branch
    %19 = sbr.rel (0) target = $region17
  $region16: #{forward.1} parent=0 // pred_region
    _
  $region17: #{forward.1} parent=0 // pred_fallthru
    _
  // Predicated region
  $region18: #{forward.1} parent=0 // pred_check
    _
  $region19: #{forward.1} parent=0 // pred_check_branch
    %21 = sbr.rel (0) target = $region21
  $region20: #{forward.1} parent=0 // pred_region
    _
  $region21: #{forward.1} parent=0 // pred_fallthru
    _
  // Predicated region
  $region22: #{forward.1} parent=0 // pred_check
    _
  $region23: #{forward.1} parent=0 // pred_check_branch
    %23 = sbr.rel (0) target = $region25
  $region24: #{forward.1} parent=0 // pred_region
    _
  $region25: #{forward.1} parent=0 // pred_fallthru
    _
  // Predicated region
  $region26: #{forward.1} parent=0 // pred_check
    _
  $region27: #{forward.1} parent=0 // pred_check_branch
    %25 = sbr.rel (0) target = $region29
  $region28: #{forward.1} parent=0 // pred_region
    _
  $region29: #{forward.1} parent=0 // pred_fallthru
    _
  %v26 = vld [vmem:[%s0] sm:$0x3]
  %v27 = vld [vmem:[%s1] sm:$0xff]
  %v28 = vld [vmem:[%s1 + $0x8] sm:$0xff]
  %v29 = vld [vmem:[%s1 + $0x10] sm:$0xff]
  %v30 = vld [vmem:[%s1 + $0x18] sm:$0xff]
  %v31 = vld [vmem:[%s4] sm:$0x1]
  %v33 = vlaneseq
  %v34 = vshrl.u32 %v33, 7
  %v35 = vsub.s32 0, %v34
  %v36 = vrot.slane %v31, %v35
  %vm38 = vcmask 261120
  %v40 = vsel %vm38, %v26, 0
  %42 = vmatprep.subr.mxu0 0.0
  %43 = vmatpush1.msra.mxu0 %v27
  %44 = vmatprep.subr.mxu0 0.0
  %45 = vmatpush1.msra.mxu0 %v28
  %46 = vmatprep.subr.mxu0 0.0
  %47 = vmatpush1.msra.mxu0 %v29
  %48 = vmatprep.subr.mxu0 0.0
  %49 = vmatpush1.msra.mxu0 %v30
  %50 = vmatprep.subr.mxu0 0.0
  %51 = vmatpush1.msra.mxu0 0.0
  %52 = vmatprep.subr.mxu0 0.0
  %53 = vmatpush1.msra.mxu0 0.0
  %54 = vmatprep.subr.mxu0 0.0
  %55 = vmatpush1.msra.mxu0 0.0
  %56 = vmatprep.subr.mxu0 0.0
  %57 = vmatpush1.msra.mxu0 0.0
  %58 = vmatprep.subr.mxu0 0.0
  %59 = vmatpush1.msra.mxu0 0.0
  %60 = vmatprep.subr.mxu0 0.0
  %61 = vmatpush1.msra.mxu0 0.0
  %62 = vmatprep.subr.mxu0 0.0
  %63 = vmatpush1.msra.mxu0 0.0
  %64 = vmatprep.subr.mxu0 0.0
  %65 = vmatpush1.msra.mxu0 0.0
  %66 = vmatprep.subr.mxu0 0.0
  %67 = vmatpush1.msra.mxu0 0.0
  %68 = vmatprep.subr.mxu0 0.0
  %69 = vmatpush1.msra.mxu0 0.0
  %70 = vmatprep.subr.mxu0 0.0
  %71 = vmatpush1.msra.mxu0 0.0
  %72 = vmatprep.subr.mxu0 0.0
  %73 = vmatpush1.msra.mxu0 0.0
  %74 = vmatprep.subr.mxu0 0.0
  %75 = vmatpush1.msra.mxu0 0.0
  %76 = vmatprep.subr.mxu0 0.0
  %77 = vmatpush1.msra.mxu0 0.0
  %78 = vmatprep.subr.mxu0 0.0
  %79 = vmatpush1.msra.mxu0 0.0
  %80 = vmatprep.subr.mxu0 0.0
  %81 = vmatpush1.msra.mxu0 0.0
  %82 = vmatprep.subr.mxu0 0.0
  %83 = vmatpush1.msra.mxu0 0.0
  %84 = vmatprep.subr.mxu0 0.0
  %85 = vmatpush1.msra.mxu0 0.0
  %86 = vmatprep.subr.mxu0 0.0
  %87 = vmatpush1.msra.mxu0 0.0
  %88 = vmatprep.subr.mxu0 0.0
  %89 = vmatpush1.msra.mxu0 0.0
  %90 = vmatprep.subr.mxu0 0.0
  %91 = vmatpush1.msra.mxu0 0.0
  %92 = vmatprep.subr.mxu0 0.0
  %93 = vmatpush1.msra.mxu0 0.0
  %94 = vmatprep.subr.mxu0 0.0
  %95 = vmatpush1.msra.mxu0 0.0
  %96 = vmatprep.subr.mxu0 0.0
  %97 = vmatpush1.msra.mxu0 0.0
  %98 = vmatprep.subr.mxu0 0.0
  %99 = vmatpush1.msra.mxu0 0.0
  %100 = vmatprep.subr.mxu0 0.0
  %101 = vmatpush1.msra.mxu0 0.0
  %102 = vmatprep.subr.mxu0 0.0
  %103 = vmatpush1.msra.mxu0 0.0
  %104 = vmatprep.subr.mxu0 0.0
  %105 = vmatpush1.msra.mxu0 0.0
  %106 = vmatprep.mubr.f32.mxu0 0.0
  %107 = vmatmul.mubr.f32.gmra.mrb[0].mxu0 %v40
  %v108 = vpop.f32.mrb[0].mxu0
  %v109 = vadd.f32 %v36, %v108
  %v110 = vpop.f32.mrb[0].mxu0
  %111 = vdwg.mxu0
  %v112 = vmax.f32 %v109, 0.0
  %v113 = vld [vmem:[%s2] sm:$0xff]
  %v114 = vld [vmem:[%s2 + $0x8] sm:$0xff]
  %v115 = vld [vmem:[%s2 + $0x10] sm:$0xff]
  %v116 = vld [vmem:[%s2 + $0x18] sm:$0xff]
  %v117 = vld [vmem:[%s2 + $0x20] sm:$0xff]
  %v118 = vld [vmem:[%s2 + $0x28] sm:$0xff]
  %v119 = vld [vmem:[%s2 + $0x30] sm:$0xff]
  %v120 = vld [vmem:[%s2 + $0x38] sm:$0xff]
  %v121 = vld [vmem:[%s2 + $0x40] sm:$0xff]
  %v122 = vld [vmem:[%s2 + $0x48] sm:$0xff]
  %v123 = vld [vmem:[%s2 + $0x50] sm:$0xff]
  %v124 = vld [vmem:[%s2 + $0x58] sm:$0xff]
  %v125 = vld [vmem:[%s2 + $0x60] sm:$0xff]
  %v126 = vld [vmem:[%s2 + $0x68] sm:$0xff]
  %v127 = vld [vmem:[%s2 + $0x70] sm:$0xff]
  %v128 = vld [vmem:[%s2 + $0x78] sm:$0xff]
  %v129 = vld [vmem:[%s5] sm:$0x1]
  %v131 = vlaneseq
  %v132 = vshrl.u32 %v131, 7
  %v133 = vsub.s32 0, %v132
  %v134 = vrot.slane %v129, %v133
  %136 = vmatprep.subr.mxu0 0.0
  %137 = vmatpush1.msra.mxu0 %v113
  %138 = vmatprep.subr.mxu0 0.0
  %139 = vmatpush1.msra.mxu0 %v114
  %140 = vmatprep.subr.mxu0 0.0
  %141 = vmatpush1.msra.mxu0 %v115
  %142 = vmatprep.subr.mxu0 0.0
  %143 = vmatpush1.msra.mxu0 %v116
  %144 = vmatprep.subr.mxu0 0.0
  %145 = vmatpush1.msra.mxu0 %v117
  %146 = vmatprep.subr.mxu0 0.0
  %147 = vmatpush1.msra.mxu0 %v118
  %148 = vmatprep.subr.mxu0 0.0
  %149 = vmatpush1.msra.mxu0 %v119
  %150 = vmatprep.subr.mxu0 0.0
  %151 = vmatpush1.msra.mxu0 %v120
  %152 = vmatprep.subr.mxu0 0.0
  %153 = vmatpush1.msra.mxu0 %v121
  %154 = vmatprep.subr.mxu0 0.0
  %155 = vmatpush1.msra.mxu0 %v122
  %156 = vmatprep.subr.mxu0 0.0
  %157 = vmatpush1.msra.mxu0 %v123
  %158 = vmatprep.subr.mxu0 0.0
  %159 = vmatpush1.msra.mxu0 %v124
  %160 = vmatprep.subr.mxu0 0.0
  %161 = vmatpush1.msra.mxu0 %v125
  %162 = vmatprep.subr.mxu0 0.0
  %163 = vmatpush1.msra.mxu0 %v126
  %164 = vmatprep.subr.mxu0 0.0
  %165 = vmatpush1.msra.mxu0 %v127
  %166 = vmatprep.subr.mxu0 0.0
  %167 = vmatpush1.msra.mxu0 %v128
  %168 = vmatprep.subr.mxu0 0.0
  %169 = vmatpush1.msra.mxu0 0.0
  %170 = vmatprep.subr.mxu0 0.0
  %171 = vmatpush1.msra.mxu0 0.0
  %172 = vmatprep.subr.mxu0 0.0
  %173 = vmatpush1.msra.mxu0 0.0
  %174 = vmatprep.subr.mxu0 0.0
  %175 = vmatpush1.msra.mxu0 0.0
  %176 = vmatprep.subr.mxu0 0.0
  %177 = vmatpush1.msra.mxu0 0.0
  %178 = vmatprep.subr.mxu0 0.0
  %179 = vmatpush1.msra.mxu0 0.0
  %180 = vmatprep.subr.mxu0 0.0
  %181 = vmatpush1.msra.mxu0 0.0
  %182 = vmatprep.subr.mxu0 0.0
  %183 = vmatpush1.msra.mxu0 0.0
  %184 = vmatprep.subr.mxu0 0.0
  %185 = vmatpush1.msra.mxu0 0.0
  %186 = vmatprep.subr.mxu0 0.0
  %187 = vmatpush1.msra.mxu0 0.0
  %188 = vmatprep.subr.mxu0 0.0
  %189 = vmatpush1.msra.mxu0 0.0
  %190 = vmatprep.subr.mxu0 0.0
  %191 = vmatpush1.msra.mxu0 0.0
  %192 = vmatprep.subr.mxu0 0.0
  %193 = vmatpush1.msra.mxu0 0.0
  %194 = vmatprep.subr.mxu0 0.0
  %195 = vmatpush1.msra.mxu0 0.0
  %196 = vmatprep.subr.mxu0 0.0
  %197 = vmatpush1.msra.mxu0 0.0
  %198 = vmatprep.subr.mxu0 0.0
  %199 = vmatpush1.msra.mxu0 0.0
  %200 = vmatprep.mubr.f32.mxu0 0.0
  %201 = vmatmul.mubr.f32.gmra.mrb[0].mxu0 %v112
  %v202 = vpop.f32.mrb[0].mxu0
  %v203 = vadd.f32 %v134, %v202
  %v204 = vpop.f32.mrb[0].mxu0
  %205 = vdwg.mxu0
  %v206 = vmax.f32 %v203, 0.0
  %v207 = vld [vmem:[%s3] sm:$0xff]
  %v208 = vld [vmem:[%s3 + $0x8] sm:$0xff]
  %v209 = vld [vmem:[%s3 + $0x10] sm:$0xff]
  %v210 = vld [vmem:[%s3 + $0x18] sm:$0xff]
  %v211 = vld [vmem:[%s3 + $0x20] sm:$0xff]
  %v212 = vld [vmem:[%s3 + $0x28] sm:$0xff]
  %v213 = vld [vmem:[%s3 + $0x30] sm:$0xff]
  %v214 = vld [vmem:[%s3 + $0x38] sm:$0xff]
  %v215 = vld [vmem:[%s3 + $0x40] sm:$0xff]
  %v216 = vld [vmem:[%s3 + $0x48] sm:$0xff]
  %v217 = vld [vmem:[%s3 + $0x50] sm:$0xff]
  %v218 = vld [vmem:[%s3 + $0x58] sm:$0xff]
  %v219 = vld [vmem:[%s3 + $0x60] sm:$0xff]
  %v220 = vld [vmem:[%s3 + $0x68] sm:$0xff]
  %v221 = vld [vmem:[%s3 + $0x70] sm:$0xff]
  %v222 = vld [vmem:[%s3 + $0x78] sm:$0xff]
  %v223 = vld [vmem:[%s6] sm:$0x1]
  %v225 = vlaneseq
  %v226 = vshrl.u32 %v225, 7
  %v227 = vsub.s32 0, %v226
  %v228 = vrot.slane %v223, %v227
  %230 = vmatprep.subr.mxu0 0.0
  %231 = vmatpush1.msra.mxu0 %v207
  %232 = vmatprep.subr.mxu0 0.0
  %233 = vmatpush1.msra.mxu0 %v208
  %234 = vmatprep.subr.mxu0 0.0
  %235 = vmatpush1.msra.mxu0 %v209
  %236 = vmatprep.subr.mxu0 0.0
  %237 = vmatpush1.msra.mxu0 %v210
  %238 = vmatprep.subr.mxu0 0.0
  %239 = vmatpush1.msra.mxu0 %v211
  %240 = vmatprep.subr.mxu0 0.0
  %241 = vmatpush1.msra.mxu0 %v212
  %242 = vmatprep.subr.mxu0 0.0
  %243 = vmatpush1.msra.mxu0 %v213
  %244 = vmatprep.subr.mxu0 0.0
  %245 = vmatpush1.msra.mxu0 %v214
  %246 = vmatprep.subr.mxu0 0.0
  %247 = vmatpush1.msra.mxu0 %v215
  %248 = vmatprep.subr.mxu0 0.0
  %249 = vmatpush1.msra.mxu0 %v216
  %250 = vmatprep.subr.mxu0 0.0
  %251 = vmatpush1.msra.mxu0 %v217
  %252 = vmatprep.subr.mxu0 0.0
  %253 = vmatpush1.msra.mxu0 %v218
  %254 = vmatprep.subr.mxu0 0.0
  %255 = vmatpush1.msra.mxu0 %v219
  %256 = vmatprep.subr.mxu0 0.0
  %257 = vmatpush1.msra.mxu0 %v220
  %258 = vmatprep.subr.mxu0 0.0
  %259 = vmatpush1.msra.mxu0 %v221
  %260 = vmatprep.subr.mxu0 0.0
  %261 = vmatpush1.msra.mxu0 %v222
  %262 = vmatprep.subr.mxu0 0.0
  %263 = vmatpush1.msra.mxu0 0.0
  %264 = vmatprep.subr.mxu0 0.0
  %265 = vmatpush1.msra.mxu0 0.0
  %266 = vmatprep.subr.mxu0 0.0
  %267 = vmatpush1.msra.mxu0 0.0
  %268 = vmatprep.subr.mxu0 0.0
  %269 = vmatpush1.msra.mxu0 0.0
  %270 = vmatprep.subr.mxu0 0.0
  %271 = vmatpush1.msra.mxu0 0.0
  %272 = vmatprep.subr.mxu0 0.0
  %273 = vmatpush1.msra.mxu0 0.0
  %274 = vmatprep.subr.mxu0 0.0
  %275 = vmatpush1.msra.mxu0 0.0
  %276 = vmatprep.subr.mxu0 0.0
  %277 = vmatpush1.msra.mxu0 0.0
  %278 = vmatprep.subr.mxu0 0.0
  %279 = vmatpush1.msra.mxu0 0.0
  %280 = vmatprep.subr.mxu0 0.0
  %281 = vmatpush1.msra.mxu0 0.0
  %282 = vmatprep.subr.mxu0 0.0
  %283 = vmatpush1.msra.mxu0 0.0
  %284 = vmatprep.subr.mxu0 0.0
  %285 = vmatpush1.msra.mxu0 0.0
  %286 = vmatprep.subr.mxu0 0.0
  %287 = vmatpush1.msra.mxu0 0.0
  %288 = vmatprep.subr.mxu0 0.0
  %289 = vmatpush1.msra.mxu0 0.0
  %290 = vmatprep.subr.mxu0 0.0
  %291 = vmatpush1.msra.mxu0 0.0
  %292 = vmatprep.subr.mxu0 0.0
  %293 = vmatpush1.msra.mxu0 0.0
  %294 = vmatprep.mubr.f32.mxu0 0.0
  %295 = vmatmul.mubr.f32.gmra.mrb[0].mxu0 %v206
  %v296 = vpop.f32.mrb[0].mxu0
  %v297 = vadd.f32 %v228, %v296
  %v298 = vpop.f32.mrb[0].mxu0
  %299 = vdwg.mxu0
  %v300 = vmax.f32 %v297, 0.0
  %vm301 = vcmask 254976
  %302 = vst.msk [vmem:[%s7] sm:$0x3] %vm301, %v300
  // Predicated region
  $region30: #{forward.1} parent=0 // pred_check
    _
  $region31: #{forward.1} parent=0 // pred_check_branch
    %304 = sbr.rel (0) target = $region33
  $region32: #{forward.1} parent=0 // pred_region
    _
  $region33: #{forward.1} parent=0 // pred_fallthru
    _
  // Predicated region
  $region34: #{forward.1} parent=0 // pred_check
    _
  $region35: #{forward.1} parent=0 // pred_check_branch
    %306 = sbr.rel (0) target = $region37
  $region36: #{forward.1} parent=0 // pred_region
    _
  $region37: #{forward.1} parent=0 // pred_fallthru
    _

// kernel: forward.1
$region0: #{forward.1}
  #allocation0 [shape = 'u32[]', space=smem, size = 0x4, offset = 0x4, fixed_abs, tag = 'smem constant byte address 0x4 - core index']
  #allocation1 [shape = 'u32[144,128]{1,0:T(1,128)}', space=vmem, size = 0x12000, scoped, tag = 'internal scratch']
  %s0 = inlined_call_operand.vmem [shape: f32[2,32], index: 0, kind: input, shape index: {}]
  %s1 = inlined_call_operand.vmem [shape: f32[32,128], index: 1, kind: input, shape index: {}]
  %s2 = inlined_call_operand.vmem [shape: f32[128,128], index: 2, kind: input, shape index: {}]
  %s3 = inlined_call_operand.vmem [shape: f32[128,32], index: 3, kind: input, shape index: {}]
  %s4 = inlined_call_operand.vmem [shape: f32[1,128], index: 4, kind: input, shape index: {}]
  %s5 = inlined_call_operand.vmem [shape: f32[1,128], index: 5, kind: input, shape index: {}]
  %s6 = inlined_call_operand.vmem [shape: f32[1,32], index: 6, kind: input, shape index: {}]
  %s7 = inlined_call_operand.vmem [shape: f32[2,32], index: 7, kind: output, shape index: {}]
  %s8 = sld [smem:[#allocation0]]
  $region38: #{forward.1} parent=0
    _
  %s10 = ssub.s32 1, %s8
  %s11 = scalar_select 0, %s10, %s8
  // Predicated region
  $region2: #{forward.1} parent=0 // pred_check
    _
  $region3: #{forward.1} parent=0 // pred_check_branch
    %13 = sbr.rel (0) target = $region5
  $region4: #{forward.1} parent=0 // pred_region
    _
  $region5: #{forward.1} parent=0 // pred_fallthru
    _
  // Predicated region
  $region6: #{forward.1} parent=0 // pred_check
    _
  $region7: #{forward.1} parent=0 // pred_check_branch
    %15 = sbr.rel (0) target = $region9
  $region8: #{forward.1} parent=0 // pred_region
    _
  $region9: #{forward.1} parent=0 // pred_fallthru
    _
  // Predicated region
  $region10: #{forward.1} parent=0 // pred_check
    _
  $region11: #{forward.1} parent=0 // pred_check_branch
    %17 = sbr.rel (0) target = $region13
  $region12: #{forward.1} parent=0 // pred_region
    _
  $region13: #{forward.1} parent=0 // pred_fallthru
    _
  // Predicated region
  $region14: #{forward.1} parent=0 // pred_check
    _
  $region15: #{forward.1} parent=0 // pred_check_branch
    %19 = sbr.rel (0) target = $region17
  $region16: #{forward.1} parent=0 // pred_region
    _
  $region17: #{forward.1} parent=0 // pred_fallthru
    _
  // Predicated region
  $region18: #{forward.1} parent=0 // pred_check
    _
  $region19: #{forward.1} parent=0 // pred_check_branch
    %21 = sbr.rel (0) target = $region21
  $region20: #{forward.1} parent=0 // pred_region
    _
  $region21: #{forward.1} parent=0 // pred_fallthru
    _
  // Predicated region
  $region22: #{forward.1} parent=0 // pred_check
    _
  $region23: #{forward.1} parent=0 // pred_check_branch
    %23 = sbr.rel (0) target = $region25
  $region24: #{forward.1} parent=0 // pred_region
    _
  $region25: #{forward.1} parent=0 // pred_fallthru
    _
  // Predicated region
  $region26: #{forward.1} parent=0 // pred_check
    _
  $region27: #{forward.1} parent=0 // pred_check_branch
    %25 = sbr.rel (0) target = $region29
  $region28: #{forward.1} parent=0 // pred_region
    _
  $region29: #{forward.1} parent=0 // pred_fallthru
    _
  %v26 = vld [vmem:[%s0] sm:$0x3]
  %v27 = vld [vmem:[%s1] sm:$0xff]
  %v28 = vld [vmem:[%s1 + $0x8] sm:$0xff]
  %v29 = vld [vmem:[%s1 + $0x10] sm:$0xff]
  %v30 = vld [vmem:[%s1 + $0x18] sm:$0xff]
  %v31 = vld [vmem:[%s4] sm:$0x1]
  %v33 = vlaneseq
  %v34 = vshrl.u32 %v33, 7
  %v35 = vsub.s32 0, %v34
  %v36 = vrot.slane %v31, %v35
  %vm38 = vcmask 261120
  %v40 = vsel %vm38, %v26, 0
  %42 = vmatprep.subr.mxu0 0.0
  %43 = vmatpush1.msra.mxu0 %v27
  %44 = vmatprep.subr.mxu0 0.0
  %45 = vmatpush1.msra.mxu0 %v28
  %46 = vmatprep.subr.mxu0 0.0
  %47 = vmatpush1.msra.mxu0 %v29
  %48 = vmatprep.subr.mxu0 0.0
  %49 = vmatpush1.msra.mxu0 %v30
  %50 = vmatprep.subr.mxu0 0.0
  %51 = vmatpush1.msra.mxu0 0.0
  %52 = vmatprep.subr.mxu0 0.0
  %53 = vmatpush1.msra.mxu0 0.0
  %54 = vmatprep.subr.mxu0 0.0
  %55 = vmatpush1.msra.mxu0 0.0
  %56 = vmatprep.subr.mxu0 0.0
  %57 = vmatpush1.msra.mxu0 0.0
  %58 = vmatprep.subr.mxu0 0.0
  %59 = vmatpush1.msra.mxu0 0.0
  %60 = vmatprep.subr.mxu0 0.0
  %61 = vmatpush1.msra.mxu0 0.0
  %62 = vmatprep.subr.mxu0 0.0
  %63 = vmatpush1.msra.mxu0 0.0
  %64 = vmatprep.subr.mxu0 0.0
  %65 = vmatpush1.msra.mxu0 0.0
  %66 = vmatprep.subr.mxu0 0.0
  %67 = vmatpush1.msra.mxu0 0.0
  %68 = vmatprep.subr.mxu0 0.0
  %69 = vmatpush1.msra.mxu0 0.0
  %70 = vmatprep.subr.mxu0 0.0
  %71 = vmatpush1.msra.mxu0 0.0
  %72 = vmatprep.subr.mxu0 0.0
  %73 = vmatpush1.msra.mxu0 0.0
  %74 = vmatprep.subr.mxu0 0.0
  %75 = vmatpush1.msra.mxu0 0.0
  %76 = vmatprep.subr.mxu0 0.0
  %77 = vmatpush1.msra.mxu0 0.0
  %78 = vmatprep.subr.mxu0 0.0
  %79 = vmatpush1.msra.mxu0 0.0
  %80 = vmatprep.subr.mxu0 0.0
  %81 = vmatpush1.msra.mxu0 0.0
  %82 = vmatprep.subr.mxu0 0.0
  %83 = vmatpush1.msra.mxu0 0.0
  %84 = vmatprep.subr.mxu0 0.0
  %85 = vmatpush1.msra.mxu0 0.0
  %86 = vmatprep.subr.mxu0 0.0
  %87 = vmatpush1.msra.mxu0 0.0
  %88 = vmatprep.subr.mxu0 0.0
  %89 = vmatpush1.msra.mxu0 0.0
  %90 = vmatprep.subr.mxu0 0.0
  %91 = vmatpush1.msra.mxu0 0.0
  %92 = vmatprep.subr.mxu0 0.0
  %93 = vmatpush1.msra.mxu0 0.0
  %94 = vmatprep.subr.mxu0 0.0
  %95 = vmatpush1.msra.mxu0 0.0
  %96 = vmatprep.subr.mxu0 0.0
  %97 = vmatpush1.msra.mxu0 0.0
  %98 = vmatprep.subr.mxu0 0.0
  %99 = vmatpush1.msra.mxu0 0.0
  %100 = vmatprep.subr.mxu0 0.0
  %101 = vmatpush1.msra.mxu0 0.0
  %102 = vmatprep.subr.mxu0 0.0
  %103 = vmatpush1.msra.mxu0 0.0
  %104 = vmatprep.subr.mxu0 0.0
  %105 = vmatpush1.msra.mxu0 0.0
  %106 = vmatprep.mubr.f32.mxu0 0.0
  %107 = vmatmul.mubr.f32.gmra.mrb[0].mxu0 %v40
  %v108 = vpop.f32.mrb[0].mxu0
  %v109 = vadd.f32 %v36, %v108
  %v110 = vpop.f32.mrb[0].mxu0
  %111 = vdwg.mxu0
  %v112 = vmax.f32 %v109, 0.0
  %v113 = vld [vmem:[%s2] sm:$0xff]
  %v114 = vld [vmem:[%s2 + $0x8] sm:$0xff]
  %v115 = vld [vmem:[%s2 + $0x10] sm:$0xff]
  %v116 = vld [vmem:[%s2 + $0x18] sm:$0xff]
  %v117 = vld [vmem:[%s2 + $0x20] sm:$0xff]
  %v118 = vld [vmem:[%s2 + $0x28] sm:$0xff]
  %v119 = vld [vmem:[%s2 + $0x30] sm:$0xff]
  %v120 = vld [vmem:[%s2 + $0x38] sm:$0xff]
  %v121 = vld [vmem:[%s2 + $0x40] sm:$0xff]
  %v122 = vld [vmem:[%s2 + $0x48] sm:$0xff]
  %v123 = vld [vmem:[%s2 + $0x50] sm:$0xff]
  %v124 = vld [vmem:[%s2 + $0x58] sm:$0xff]
  %v125 = vld [vmem:[%s2 + $0x60] sm:$0xff]
  %v126 = vld [vmem:[%s2 + $0x68] sm:$0xff]
  %v127 = vld [vmem:[%s2 + $0x70] sm:$0xff]
  %v128 = vld [vmem:[%s2 + $0x78] sm:$0xff]
  %v129 = vld [vmem:[%s5] sm:$0x1]
  %v131 = vlaneseq
  %v132 = vshrl.u32 %v131, 7
  %v133 = vsub.s32 0, %v132
  %v134 = vrot.slane %v129, %v133
  %136 = vmatprep.subr.mxu0 0.0
  %137 = vmatpush1.msra.mxu0 %v113
  %138 = vmatprep.subr.mxu0 0.0
  %139 = vmatpush1.msra.mxu0 %v114
  %140 = vmatprep.subr.mxu0 0.0
  %141 = vmatpush1.msra.mxu0 %v115
  %142 = vmatprep.subr.mxu0 0.0
  %143 = vmatpush1.msra.mxu0 %v116
  %144 = vmatprep.subr.mxu0 0.0
  %145 = vmatpush1.msra.mxu0 %v117
  %146 = vmatprep.subr.mxu0 0.0
  %147 = vmatpush1.msra.mxu0 %v118
  %148 = vmatprep.subr.mxu0 0.0
  %149 = vmatpush1.msra.mxu0 %v119
  %150 = vmatprep.subr.mxu0 0.0
  %151 = vmatpush1.msra.mxu0 %v120
  %152 = vmatprep.subr.mxu0 0.0
  %153 = vmatpush1.msra.mxu0 %v121
  %154 = vmatprep.subr.mxu0 0.0
  %155 = vmatpush1.msra.mxu0 %v122
  %156 = vmatprep.subr.mxu0 0.0
  %157 = vmatpush1.msra.mxu0 %v123
  %158 = vmatprep.subr.mxu0 0.0
  %159 = vmatpush1.msra.mxu0 %v124
  %160 = vmatprep.subr.mxu0 0.0
  %161 = vmatpush1.msra.mxu0 %v125
  %162 = vmatprep.subr.mxu0 0.0
  %163 = vmatpush1.msra.mxu0 %v126
  %164 = vmatprep.subr.mxu0 0.0
  %165 = vmatpush1.msra.mxu0 %v127
  %166 = vmatprep.subr.mxu0 0.0
  %167 = vmatpush1.msra.mxu0 %v128
  %168 = vmatprep.subr.mxu0 0.0
  %169 = vmatpush1.msra.mxu0 0.0
  %170 = vmatprep.subr.mxu0 0.0
  %171 = vmatpush1.msra.mxu0 0.0
  %172 = vmatprep.subr.mxu0 0.0
  %173 = vmatpush1.msra.mxu0 0.0
  %174 = vmatprep.subr.mxu0 0.0
  %175 = vmatpush1.msra.mxu0 0.0
  %176 = vmatprep.subr.mxu0 0.0
  %177 = vmatpush1.msra.mxu0 0.0
  %178 = vmatprep.subr.mxu0 0.0
  %179 = vmatpush1.msra.mxu0 0.0
  %180 = vmatprep.subr.mxu0 0.0
  %181 = vmatpush1.msra.mxu0 0.0
  %182 = vmatprep.subr.mxu0 0.0
  %183 = vmatpush1.msra.mxu0 0.0
  %184 = vmatprep.subr.mxu0 0.0
  %185 = vmatpush1.msra.mxu0 0.0
  %186 = vmatprep.subr.mxu0 0.0
  %187 = vmatpush1.msra.mxu0 0.0
  %188 = vmatprep.subr.mxu0 0.0
  %189 = vmatpush1.msra.mxu0 0.0
  %190 = vmatprep.subr.mxu0 0.0
  %191 = vmatpush1.msra.mxu0 0.0
  %192 = vmatprep.subr.mxu0 0.0
  %193 = vmatpush1.msra.mxu0 0.0
  %194 = vmatprep.subr.mxu0 0.0
  %195 = vmatpush1.msra.mxu0 0.0
  %196 = vmatprep.subr.mxu0 0.0
  %197 = vmatpush1.msra.mxu0 0.0
  %198 = vmatprep.subr.mxu0 0.0
  %199 = vmatpush1.msra.mxu0 0.0
  %200 = vmatprep.mubr.f32.mxu0 0.0
  %201 = vmatmul.mubr.f32.gmra.mrb[0].mxu0 %v112
  %v202 = vpop.f32.mrb[0].mxu0
  %v203 = vadd.f32 %v134, %v202
  %v204 = vpop.f32.mrb[0].mxu0
  %205 = vdwg.mxu0
  %v206 = vmax.f32 %v203, 0.0
  %v207 = vld [vmem:[%s3] sm:$0xff]
  %v208 = vld [vmem:[%s3 + $0x8] sm:$0xff]
  %v209 = vld [vmem:[%s3 + $0x10] sm:$0xff]
  %v210 = vld [vmem:[%s3 + $0x18] sm:$0xff]
  %v211 = vld [vmem:[%s3 + $0x20] sm:$0xff]
  %v212 = vld [vmem:[%s3 + $0x28] sm:$0xff]
  %v213 = vld [vmem:[%s3 + $0x30] sm:$0xff]
  %v214 = vld [vmem:[%s3 + $0x38] sm:$0xff]
  %v215 = vld [vmem:[%s3 + $0x40] sm:$0xff]
  %v216 = vld [vmem:[%s3 + $0x48] sm:$0xff]
  %v217 = vld [vmem:[%s3 + $0x50] sm:$0xff]
  %v218 = vld [vmem:[%s3 + $0x58] sm:$0xff]
  %v219 = vld [vmem:[%s3 + $0x60] sm:$0xff]
  %v220 = vld [vmem:[%s3 + $0x68] sm:$0xff]
  %v221 = vld [vmem:[%s3 + $0x70] sm:$0xff]
  %v222 = vld [vmem:[%s3 + $0x78] sm:$0xff]
  %v223 = vld [vmem:[%s6] sm:$0x1]
  %v225 = vlaneseq
  %v226 = vshrl.u32 %v225, 7
  %v227 = vsub.s32 0, %v226
  %v228 = vrot.slane %v223, %v227
  %230 = vmatprep.subr.mxu0 0.0
  %231 = vmatpush1.msra.mxu0 %v207
  %232 = vmatprep.subr.mxu0 0.0
  %233 = vmatpush1.msra.mxu0 %v208
  %234 = vmatprep.subr.mxu0 0.0
  %235 = vmatpush1.msra.mxu0 %v209
  %236 = vmatprep.subr.mxu0 0.0
  %237 = vmatpush1.msra.mxu0 %v210
  %238 = vmatprep.subr.mxu0 0.0
  %239 = vmatpush1.msra.mxu0 %v211
  %240 = vmatprep.subr.mxu0 0.0
  %241 = vmatpush1.msra.mxu0 %v212
  %242 = vmatprep.subr.mxu0 0.0
  %243 = vmatpush1.msra.mxu0 %v213
  %244 = vmatprep.subr.mxu0 0.0
  %245 = vmatpush1.msra.mxu0 %v214
  %246 = vmatprep.subr.mxu0 0.0
  %247 = vmatpush1.msra.mxu0 %v215
  %248 = vmatprep.subr.mxu0 0.0
  %249 = vmatpush1.msra.mxu0 %v216
  %250 = vmatprep.subr.mxu0 0.0
  %251 = vmatpush1.msra.mxu0 %v217
  %252 = vmatprep.subr.mxu0 0.0
  %253 = vmatpush1.msra.mxu0 %v218
  %254 = vmatprep.subr.mxu0 0.0
  %255 = vmatpush1.msra.mxu0 %v219
  %256 = vmatprep.subr.mxu0 0.0
  %257 = vmatpush1.msra.mxu0 %v220
  %258 = vmatprep.subr.mxu0 0.0
  %259 = vmatpush1.msra.mxu0 %v221
  %260 = vmatprep.subr.mxu0 0.0
  %261 = vmatpush1.msra.mxu0 %v222
  %262 = vmatprep.subr.mxu0 0.0
  %263 = vmatpush1.msra.mxu0 0.0
  %264 = vmatprep.subr.mxu0 0.0
  %265 = vmatpush1.msra.mxu0 0.0
  %266 = vmatprep.subr.mxu0 0.0
  %267 = vmatpush1.msra.mxu0 0.0
  %268 = vmatprep.subr.mxu0 0.0
  %269 = vmatpush1.msra.mxu0 0.0
  %270 = vmatprep.subr.mxu0 0.0
  %271 = vmatpush1.msra.mxu0 0.0
  %272 = vmatprep.subr.mxu0 0.0
  %273 = vmatpush1.msra.mxu0 0.0
  %274 = vmatprep.subr.mxu0 0.0
  %275 = vmatpush1.msra.mxu0 0.0
  %276 = vmatprep.subr.mxu0 0.0
  %277 = vmatpush1.msra.mxu0 0.0
  %278 = vmatprep.subr.mxu0 0.0
  %279 = vmatpush1.msra.mxu0 0.0
  %280 = vmatprep.subr.mxu0 0.0
  %281 = vmatpush1.msra.mxu0 0.0
  %282 = vmatprep.subr.mxu0 0.0
  %283 = vmatpush1.msra.mxu0 0.0
  %284 = vmatprep.subr.mxu0 0.0
  %285 = vmatpush1.msra.mxu0 0.0
  %286 = vmatprep.subr.mxu0 0.0
  %287 = vmatpush1.msra.mxu0 0.0
  %288 = vmatprep.subr.mxu0 0.0
  %289 = vmatpush1.msra.mxu0 0.0
  %290 = vmatprep.subr.mxu0 0.0
  %291 = vmatpush1.msra.mxu0 0.0
  %292 = vmatprep.subr.mxu0 0.0
  %293 = vmatpush1.msra.mxu0 0.0
  %294 = vmatprep.mubr.f32.mxu0 0.0
  %295 = vmatmul.mubr.f32.gmra.mrb[0].mxu0 %v206
  %v296 = vpop.f32.mrb[0].mxu0
  %v297 = vadd.f32 %v228, %v296
  %v298 = vpop.f32.mrb[0].mxu0
  %299 = vdwg.mxu0
  %v300 = vmax.f32 %v297, 0.0
  %vm301 = vcmask 254976
  %302 = vst.msk [vmem:[%s7] sm:$0x3] %vm301, %v300
  // Predicated region
  $region30: #{forward.1} parent=0 // pred_check
    _
  $region31: #{forward.1} parent=0 // pred_check_branch
    %304 = sbr.rel (0) target = $region33
  $region32: #{forward.1} parent=0 // pred_region
    _
  $region33: #{forward.1} parent=0 // pred_fallthru
    _
  // Predicated region
  $region34: #{forward.1} parent=0 // pred_check
    _
  $region35: #{forward.1} parent=0 // pred_check_branch
    %306 = sbr.rel (0) target = $region37
  $region36: #{forward.1} parent=0 // pred_region
    _
  $region37: #{forward.1} parent=0 // pred_fallthru
    _

</llo_original>
